<compile_context>
chip_gen: v5e
topology: v5e:2x2
jax: 0.10.0
libtpu: 0.0.40
codegen_flags: <defaults>
</compile_context>

<pallas_src>
import functools

import jax
import jax.numpy as jnp
from jax.experimental import pallas as pl
from jax.experimental.pallas import tpu as pltpu


def _round_up(x, m):
    return ((x + m - 1) // m) * m


def _se_kernel(x_ref, w1_ref, b1_ref, w2_ref, b2_ref, o_ref, acc_ref, *, inv_hw):
    # x_ref : (b_tile, C, tile_hw)      acc_ref : (b_tile, C) f32 scratch
    # w1    : (C, fc_dim)   b1 : (1, fc_dim)
    # w2    : (fc_dim, C_out) b2 : (1, C_out)   o_ref : (b_tile, C_out)
    k = pl.program_id(1)

    @pl.when(k == 0)
    def _():
        acc_ref[...] = jnp.zeros_like(acc_ref)

    # Partial spatial SUM for this tile (lane reduce); mean is applied once at
    # the end with the hoisted 1/(H*W) constant.
    acc_ref[...] += jnp.sum(x_ref[...].astype(jnp.float32), axis=-1)

    @pl.when(k == pl.num_programs(1) - 1)
    def _():
        y = acc_ref[...] * inv_hw                                        # (b_tile, C)
        # Tiny FC stack: executed exactly once per batch tile (epilogue only).
        h = jnp.dot(y, w1_ref[...], preferred_element_type=jnp.float32) + b1_ref[...]
        h = jnp.maximum(h, 0.0)                                          # (b_tile, fc_dim)
        s = jnp.dot(h, w2_ref[...], preferred_element_type=jnp.float32) + b2_ref[...]
        s = jax.nn.sigmoid(s)                                            # (b_tile, C_out)
        # torch.ones_like(y) - y
        o_ref[...] = (1.0 - s).astype(o_ref.dtype)


def se_layer(x, w1, b1, w2, b2):
    """x: (B, C, H, W). Returns (B, C_out, 1, 1) fp32."""
    B, C, H, W = x.shape
    fc_dim = w1.shape[1]
    C_out = w2.shape[1]
    HW = H * W
    itemsize = jnp.dtype(x.dtype).itemsize

    # Batch tile: full batch if small, else 8 (keeps the "parallel" axis useful).
    b_tile = B if B < 8 else 8
    b_pad = _round_up(B, b_tile)

    # Spatial tile: large multiple of 128 lanes, capped by a per-buffer VMEM
    # budget (double-buffered by the pipeline) and by the padded extent.
    budget_bytes = 8 * 1024 * 1024
    max_tile_by_budget = max(128, (budget_bytes // max(1, b_tile * C * itemsize)) // 128 * 128)
    tile_hw = min(2048, max_tile_by_budget, _round_up(HW, 128))
    hw_pad = _round_up(HW, tile_hw)

    x_flat = x.reshape(B, C, HW)
    if hw_pad != HW or b_pad != B:
        # Zero padding: contributes nothing to the sum; divisor stays true H*W.
        x_flat = jnp.pad(x_flat, ((0, b_pad - B), (0, 0), (0, hw_pad - HW)))

    grid = (b_pad // b_tile, hw_pad // tile_hw)
    kernel = functools.partial(_se_kernel, inv_hw=1.0 / float(HW))

    cost = pl.CostEstimate(
        flops=B * C * HW + 2 * B * (C * fc_dim + fc_dim * C_out),
        transcendentals=B * C_out,
        bytes_accessed=(
            b_pad * C * hw_pad * itemsize
            + (w1.size + b1.size + w2.size + b2.size) * 4
            + b_pad * C_out * 4
        ),
    )

    out = pl.pallas_call(
        kernel,
        out_shape=jax.ShapeDtypeStruct((b_pad, C_out), jnp.float32),
        grid_spec=pltpu.PrefetchScalarGridSpec(
            num_scalar_prefetch=0,
            grid=grid,
            in_specs=[
                pl.BlockSpec((b_tile, C, tile_hw), lambda b, k: (b, 0, k)),
                pl.BlockSpec((C, fc_dim), lambda b, k: (0, 0)),
                pl.BlockSpec((1, fc_dim), lambda b, k: (0, 0)),
                pl.BlockSpec((fc_dim, C_out), lambda b, k: (0, 0)),
                pl.BlockSpec((1, C_out), lambda b, k: (0, 0)),
            ],
            out_specs=pl.BlockSpec((b_tile, C_out), lambda b, k: (b, 0)),
            scratch_shapes=[pltpu.VMEM((b_tile, C), jnp.float32)],
        ),
        compiler_params=pltpu.CompilerParams(
            dimension_semantics=("parallel", "arbitrary"),
            vmem_limit_bytes=32 * 1024 * 1024,
        ),
        cost_estimate=cost,
    )(x_flat, w1, b1.reshape(1, fc_dim), w2, b2.reshape(1, C_out))

    return out[:B].reshape(B, C_out, 1, 1)


def _reference(x, w1, b1, w2, b2):
    # Pure-JAX reference mirroring the PyTorch forward.
    y = jnp.mean(x.astype(jnp.float32), axis=(2, 3))  # (B, C)
    h = jnp.maximum(y @ w1 + b1, 0.0)
    s = jax.nn.sigmoid(h @ w2 + b2)
    return (1.0 - s)[:, :, None, None]


if __name__ == "__main__":
    # Module config: inchannel = outchannel = 4, reduction = 2 -> fc_dim = 2
    B, C, H, W = 2, 4, 16, 16
    inchannel, outchannel, reduction = C, 4, 2
    fc_dim = outchannel // reduction

    key = jax.random.PRNGKey(0)
    kx, k1, kb1, k2, kb2 = jax.random.split(key, 5)

    x = jax.random.normal(kx, (B, C, H, W), dtype=jnp.float32)
    # Deterministic synthetic parameters (stored as (in, out), i.e. W.T vs PyTorch).
    w1 = jax.random.normal(k1, (inchannel, fc_dim), dtype=jnp.float32) * 0.1
    b1 = jax.random.normal(kb1, (fc_dim,), dtype=jnp.float32) * 0.1
    w2 = jax.random.normal(k2, (fc_dim, outchannel), dtype=jnp.float32) * 0.1
    b2 = jax.random.normal(kb2, (outchannel,), dtype=jnp.float32) * 0.1

    out = se_layer(x, w1, b1, w2, b2)
    out = jax.block_until_ready(out)

    ref = _reference(x, w1, b1, w2, b2)
    assert out.shape == (B, outchannel, 1, 1), out.shape
    assert jnp.allclose(out, ref, atol=1e-5, rtol=1e-5), "mismatch vs reference"

    print("KERNEL_OK")
</pallas_src>

<mosaic_0001>
module attributes {stable_mosaic.version = 11 : i64} {
  func.func @_se_kernel(%arg0: i32, %arg1: i32, %arg2: memref<2x4x256xf32, #tpu.memory_space<vmem>>, %arg3: memref<4x2xf32, #tpu.memory_space<vmem>>, %arg4: memref<1x2xf32, #tpu.memory_space<vmem>>, %arg5: memref<2x4xf32, #tpu.memory_space<vmem>>, %arg6: memref<1x4xf32, #tpu.memory_space<vmem>>, %arg7: memref<2x4xf32, #tpu.memory_space<vmem>>, %arg8: memref<2x4xf32, #tpu.memory_space<vmem>>) attributes {dimension_semantics = [#tpu.dimension_semantics<parallel>, #tpu.dimension_semantics<arbitrary>], iteration_bounds = array<i64: 1, 1>, scalar_prefetch = 0 : i64, scratch_operands = 1 : i64, tpu.core_type = #tpu.core_type<tc>, window_params = [{transform_indices = @transform_0, window_bounds = array<i64: 2, 4, 256>}, {pipeline_mode = #tpu.pipeline_mode<synchronous>, transform_indices = @transform_1, window_bounds = array<i64: 4, 2>}, {pipeline_mode = #tpu.pipeline_mode<synchronous>, transform_indices = @transform_2, window_bounds = array<i64: 1, 2>}, {pipeline_mode = #tpu.pipeline_mode<synchronous>, transform_indices = @transform_3, window_bounds = array<i64: 2, 4>}, {pipeline_mode = #tpu.pipeline_mode<synchronous>, transform_indices = @transform_4, window_bounds = array<i64: 1, 4>}, {transform_indices = @transform_5, window_bounds = array<i64: 2, 4>}]} {
    %c0_i32 = arith.constant 0 : i32
    %0 = arith.cmpi eq, %arg1, %c0_i32 : i32
    %1 = arith.extui %0 : i1 to i32
    %c0_i32_0 = arith.constant 0 : i32
    %2 = arith.cmpi ne, %1, %c0_i32_0 : i32
    scf.if %2 {
      %cst_9 = arith.constant 0.000000e+00 : f32
      %11 = vector.broadcast %cst_9 : f32 to vector<2x4xf32>
      %c0_10 = arith.constant 0 : index
      %c0_11 = arith.constant 0 : index
      %12 = vector.load %arg8[%c0_10, %c0_11] : memref<2x4xf32, #tpu.memory_space<vmem>>, vector<2x4xf32>
      tpu.vector_store %arg8[%c0_10, %c0_11], %11 {strides = array<i32>} : memref<2x4xf32, #tpu.memory_space<vmem>>, vector<2x4xf32>,
    } else {
    }
    %c0 = arith.constant 0 : index
    %c0_1 = arith.constant 0 : index
    %3 = vector.load %arg8[%c0, %c0_1] : memref<2x4xf32, #tpu.memory_space<vmem>>, vector<2x4xf32>
    %c0_2 = arith.constant 0 : index
    %c0_3 = arith.constant 0 : index
    %c0_4 = arith.constant 0 : index
    %4 = vector.load %arg2[%c0_2, %c0_3, %c0_4] : memref<2x4x256xf32, #tpu.memory_space<vmem>>, vector<2x4x256xf32>
    %cst = arith.constant dense<0.000000e+00> : vector<2x4xf32>
    %5 = vector.multi_reduction <add>, %4, %cst [2] : vector<2x4x256xf32> to vector<2x4xf32>
    %6 = arith.addf %3, %5 : vector<2x4xf32>
    %c0_5 = arith.constant 0 : index
    %c0_6 = arith.constant 0 : index
    %7 = vector.load %arg8[%c0_5, %c0_6] : memref<2x4xf32, #tpu.memory_space<vmem>>, vector<2x4xf32>
    tpu.vector_store %arg8[%c0_5, %c0_6], %6 {strides = array<i32>} : memref<2x4xf32, #tpu.memory_space<vmem>>, vector<2x4xf32>,
    %c0_i32_7 = arith.constant 0 : i32
    %8 = arith.cmpi eq, %arg1, %c0_i32_7 : i32
    %9 = arith.extui %8 : i1 to i32
    %c0_i32_8 = arith.constant 0 : i32
    %10 = arith.cmpi ne, %9, %c0_i32_8 : i32
    scf.if %10 {
      %c0_9 = arith.constant 0 : index
      %c0_10 = arith.constant 0 : index
      %11 = vector.load %arg8[%c0_9, %c0_10] : memref<2x4xf32, #tpu.memory_space<vmem>>, vector<2x4xf32>
      %cst_11 = arith.constant 3.906250e-03 : f32
      %12 = vector.broadcast %cst_11 : f32 to vector<2x4xf32>
      %13 = arith.mulf %11, %12 : vector<2x4xf32>
      %c0_12 = arith.constant 0 : index
      %c0_13 = arith.constant 0 : index
      %14 = vector.load %arg3[%c0_12, %c0_13] : memref<4x2xf32, #tpu.memory_space<vmem>>, vector<4x2xf32>
      %cst_14 = arith.constant dense<0.000000e+00> : vector<2x2xf32>
      %15 = tpu.matmul %13, %14, %cst_14 {dimension_numbers = #tpu.dot_dimension_numbers<[1], [0], [0], [1], [0, 0, 1, 1], [], []>} : vector<2x4xf32>, vector<4x2xf32>, vector<2x2xf32> -> vector<2x2xf32>
      %c0_15 = arith.constant 0 : index
      %c0_16 = arith.constant 0 : index
      %16 = vector.load %arg4[%c0_15, %c0_16] : memref<1x2xf32, #tpu.memory_space<vmem>>, vector<1x2xf32>
      %17 = vector.broadcast %16 : vector<1x2xf32> to vector<2x2xf32>
      %18 = arith.addf %15, %17 : vector<2x2xf32>
      %cst_17 = arith.constant 0.000000e+00 : f32
      %19 = vector.broadcast %cst_17 : f32 to vector<2x2xf32>
      %20 = arith.maximumf %18, %19 : vector<2x2xf32>
      %c0_18 = arith.constant 0 : index
      %c0_19 = arith.constant 0 : index
      %21 = vector.load %arg5[%c0_18, %c0_19] : memref<2x4xf32, #tpu.memory_space<vmem>>, vector<2x4xf32>
      %cst_20 = arith.constant dense<0.000000e+00> : vector<2x4xf32>
      %22 = tpu.matmul %20, %21, %cst_20 {dimension_numbers = #tpu.dot_dimension_numbers<[1], [0], [0], [1], [0, 0, 1, 1], [], []>} : vector<2x2xf32>, vector<2x4xf32>, vector<2x4xf32> -> vector<2x4xf32>
      %c0_21 = arith.constant 0 : index
      %c0_22 = arith.constant 0 : index
      %23 = vector.load %arg6[%c0_21, %c0_22] : memref<1x4xf32, #tpu.memory_space<vmem>>, vector<1x4xf32>
      %24 = vector.broadcast %23 : vector<1x4xf32> to vector<2x4xf32>
      %25 = arith.addf %22, %24 : vector<2x4xf32>
      %26 = arith.negf %25 : vector<2x4xf32>
      %27 = math.exp %26 : vector<2x4xf32>
      %cst_23 = arith.constant 1.000000e+00 : f32
      %28 = vector.broadcast %cst_23 : f32 to vector<2x4xf32>
      %29 = arith.addf %28, %27 : vector<2x4xf32>
      %30 = arith.divf %28, %29 : vector<2x4xf32>
      %cst_24 = arith.constant 1.000000e+00 : f32
      %31 = vector.broadcast %cst_24 : f32 to vector<2x4xf32>
      %32 = arith.subf %31, %30 : vector<2x4xf32>
      %c0_25 = arith.constant 0 : index
      %c0_26 = arith.constant 0 : index
      %33 = vector.load %arg7[%c0_25, %c0_26] : memref<2x4xf32, #tpu.memory_space<vmem>>, vector<2x4xf32>
      tpu.vector_store %arg7[%c0_25, %c0_26], %32 {strides = array<i32>} : memref<2x4xf32, #tpu.memory_space<vmem>>, vector<2x4xf32>,
    } else {
    }
    return
  }
  func.func @transform_0(%arg0: i32, %arg1: i32) -> (i32, i32, i32) {
    %c0_i32 = arith.constant 0 : i32
    %c0_i32_0 = arith.constant 0 : i32
    return %arg0, %c0_i32, %arg1 : i32, i32, i32
  }
  func.func @transform_1(%arg0: i32, %arg1: i32) -> (i32, i32) {
    %c0_i32 = arith.constant 0 : i32
    %c0_i32_0 = arith.constant 0 : i32
    %c0_i32_1 = arith.constant 0 : i32
    return %c0_i32, %c0_i32_0 : i32, i32
  }
  func.func @transform_2(%arg0: i32, %arg1: i32) -> (i32, i32) {
    %c0_i32 = arith.constant 0 : i32
    %c0_i32_0 = arith.constant 0 : i32
    %c0_i32_1 = arith.constant 0 : i32
    return %c0_i32, %c0_i32_0 : i32, i32
  }
  func.func @transform_3(%arg0: i32, %arg1: i32) -> (i32, i32) {
    %c0_i32 = arith.constant 0 : i32
    %c0_i32_0 = arith.constant 0 : i32
    %c0_i32_1 = arith.constant 0 : i32
    return %c0_i32, %c0_i32_0 : i32, i32
  }
  func.func @transform_4(%arg0: i32, %arg1: i32) -> (i32, i32) {
    %c0_i32 = arith.constant 0 : i32
    %c0_i32_0 = arith.constant 0 : i32
    %c0_i32_1 = arith.constant 0 : i32
    return %c0_i32, %c0_i32_0 : i32, i32
  }
  func.func @transform_5(%arg0: i32, %arg1: i32) -> (i32, i32) {
    %c0_i32 = arith.constant 0 : i32
    %c0_i32_0 = arith.constant 0 : i32
    return %arg0, %c0_i32 : i32, i32
  }
}

</mosaic_0001>

<llo_original>
// kernel: tpu_custom_call.1
$region0: #{tpu_custom_call.1}
  #allocation0 [shape = 'u32[]', space=smem, size = 0x4, offset = 0x4, fixed_abs, tag = 'smem constant byte address 0x4 - core index']
  #allocation1 [shape = 'u32[72,128]{1,0:T(1,128)}', space=vmem, size = 0x9000, scoped, tag = 'internal scratch']
  #allocation2 [shape = 'f32[2,4]{1,0:T(2,128)}', space=vmem, size = 0x400, scoped, tag = 'scratch operand']
  %s0 = inlined_call_operand.hbm [shape: f32[2,4,256], index: 0, kind: input, shape index: {}]
  %s1 = inlined_call_operand.vmem [shape: f32[4,2], index: 1, kind: input, shape index: {}]
  %s2 = inlined_call_operand.vmem [shape: f32[1,2], index: 2, kind: input, shape index: {}]
  %s3 = inlined_call_operand.vmem [shape: f32[2,4], index: 3, kind: input, shape index: {}]
  %s4 = inlined_call_operand.vmem [shape: f32[1,4], index: 4, kind: input, shape index: {}]
  %s5 = inlined_call_operand.hbm [shape: f32[2,4], index: 5, kind: output, shape index: {}]
  %s6 = sld [smem:[#allocation0]]
  $region42: #{tpu_custom_call.1} parent=0
    _
  %s8 = ssub.s32 1, %s6
  %s9 = scalar_select 0, %s8, %s6
  $region1: #{tpu_custom_call.1} parent=0
    #allocation3 [shape = 'u8[8192]{0}', space=vmem, size = 0x2000, scoped, tag = 'input window, operand 0, single buffered']
    #allocation4 [shape = 's32[1]{0}', space=sflag, size = 0x4, scoped, tag = 'scoped memory for tpu_custom_call.1']
    #allocation5 [shape = 's32[1]{0}', space=sflag, size = 0x4, scoped, tag = 'scoped memory for tpu_custom_call.1']
    #allocation6 [shape = 'u8[1024]{0}', space=vmem, size = 0x400, scoped, tag = 'output window, operand 0, single buffered']
    %10 = vsyncpa [#allocation4], 0
    %11 = vsyncpa [#allocation5], 0
    // Predicated region
    $region2: #{tpu_custom_call.1} parent=1 // pred_check
      _
    $region3: #{tpu_custom_call.1} parent=1 // pred_check_branch
      %13 = sbr.rel (0) target = $region5
    $region4: #{tpu_custom_call.1} parent=1 // pred_region
      %15 = vsyncadd [#allocation4], 0
      %s16 = sshll.u32 %s0, 4
      %s17 = int_to_ptr.hbm [resolvable:$true] %s16
      %s18 = sshll.u32 [#allocation3], 4
      %s19 = int_to_ptr.vmem [resolvable:$true] %s18
      %24 = dma.hbm_to_vmem [thread:$0]  %s17, 256, %s19, [#allocation4], 128, 128, 8
    $region5: #{tpu_custom_call.1} parent=1 // pred_fallthru
      _
    // Predicated region
    $region6: #{tpu_custom_call.1} parent=1 // pred_check
      _
    $region7: #{tpu_custom_call.1} parent=1 // pred_check_branch
      %26 = sbr.rel (0) target = $region9
    $region8: #{tpu_custom_call.1} parent=1 // pred_region
      _
    $region9: #{tpu_custom_call.1} parent=1 // pred_fallthru
      _
    // Predicated region
    $region10: #{tpu_custom_call.1} parent=1 // pred_check
      _
    $region11: #{tpu_custom_call.1} parent=1 // pred_check_branch
      %28 = sbr.rel (0) target = $region13
    $region12: #{tpu_custom_call.1} parent=1 // pred_region
      _
    $region13: #{tpu_custom_call.1} parent=1 // pred_fallthru
      _
    // Predicated region
    $region14: #{tpu_custom_call.1} parent=1 // pred_check
      _
    $region15: #{tpu_custom_call.1} parent=1 // pred_check_branch
      %30 = sbr.rel (0) target = $region17
    $region16: #{tpu_custom_call.1} parent=1 // pred_region
      _
    $region17: #{tpu_custom_call.1} parent=1 // pred_fallthru
      _
    // Predicated region
    $region18: #{tpu_custom_call.1} parent=1 // pred_check
      _
    $region19: #{tpu_custom_call.1} parent=1 // pred_check_branch
      %32 = sbr.rel (0) target = $region21
    $region20: #{tpu_custom_call.1} parent=1 // pred_region
      _
    $region21: #{tpu_custom_call.1} parent=1 // pred_fallthru
      _
    // Predicated region
    $region22: #{tpu_custom_call.1} parent=1 // pred_check
      _
    $region23: #{tpu_custom_call.1} parent=1 // pred_check_branch
      %34 = sbr.rel (0) target = $region25
    $region24: #{tpu_custom_call.1} parent=1 // pred_region
      %36 = dma.done [#allocation4], 256
    $region25: #{tpu_custom_call.1} parent=1 // pred_fallthru
      _
    %p37 = scmp.eq.s32.totalorder 0, 0
    // Predicated region
    $region26: #{tpu_custom_call.1} parent=1 // pred_check
      %p38 = pneg %p37
    $region27: #{tpu_custom_call.1} parent=1 // pred_check_branch
      %40 = sbr.rel (%p38) target = $region29
    $region28: #{tpu_custom_call.1} parent=1 // pred_region
      %vm41 = vcmask 25600
      %42 = vst.msk [vmem:[#allocation2] sm:$0x3] %vm41, 0.0
    $region29: #{tpu_custom_call.1} parent=1 // pred_fallthru
      _
    %v43 = vld [vmem:[#allocation2] sm:$0x3]
    %v44 = vld [vmem:[#allocation3] sm:$0xff]
    %v45 = vld [vmem:[#allocation3 + $0x8] sm:$0xff]
    %48 = vst [vmem:[#allocation1] ss:$2 sm:$0xff] %v44
    %v49 = vld.sshfl [vmem:[#allocation1] sm:$0xff pattern:$0x75316420]
    %v50 = vld.sshfl [vmem:[#allocation1 + $0x8] sm:$0xff pattern:$0x75316420]
    %s51 = scalar_lea.vmem [#allocation1], 16
    %52 = vst [vmem:[%s51] ss:$2 sm:$0xff] %v45
    %v53 = vld.sshfl [vmem:[#allocation1 + $0x10] sm:$0xff pattern:$0x75316420]
    %v54 = vld.sshfl [vmem:[#allocation1 + $0x18] sm:$0xff pattern:$0x75316420]
    %vm59 = vcmask 1043456
    %v60 = vsel %vm59, %v49, 0.0
    %v61 = vsel %vm59, %v50, 0.0
    %v62 = vadd.f32 %v60, %v61
    %63 = vadd.xlane.f32.xlu0 %v62
    %v64 = vpop.xlane.xlu0 %63
    %v65 = vsel %vm59, %v53, 0.0
    %v66 = vsel %vm59, %v54, 0.0
    %v67 = vadd.f32 %v65, %v66
    %68 = vadd.xlane.f32.xlu0 %v67
    %v69 = vpop.xlane.xlu0 %68
    %v72 = vlaneseq
    %v73 = vand.u32 %v72, 127
    %v74 = vperm.slane %v64, %v73
    %v75 = vperm.slane %v69, %v73
    %vm76 = vcmask 1041409
    %v77 = vsel %vm76, %v75, %v74
    %v79 = vadd.f32 %v43, %v77
    %vm80 = vcmask 25600
    %81 = vst.msk [vmem:[#allocation2] sm:$0x3] %vm80, %v79
    // Predicated region
    $region30: #{tpu_custom_call.1} parent=1 // pred_check
      %p82 = pneg %p37
    $region31: #{tpu_custom_call.1} parent=1 // pred_check_branch
      %84 = sbr.rel (%p82) target = $region33
    $region32: #{tpu_custom_call.1} parent=1 // pred_region
      %v85 = vld [vmem:[#allocation2] sm:$0x3]
      %v86 = vmul.f32 %v85, 0.00390625
      %v87 = vld [vmem:[%s1] sm:$0xf]
      %v88 = vld [vmem:[%s2] sm:$0x1]
      %v90 = vperm.slane %v88, 0
      %vm92 = vcmask 31744
      %v94 = vsel %vm92, %v86, 0
      %v97 = vsel %vm59, %v87, 0
      %99 = vmatpush.msra.mxu0 0.0
      %100 = vmatpush.msra.mxu0 0.0
      %101 = vmatpush.msra.mxu0 0.0
      %102 = vmatpush.msra.mxu0 0.0
      %103 = vmatpush.msra.mxu0 0.0
      %104 = vmatpush.msra.mxu0 0.0
      %105 = vmatpush.msra.mxu0 0.0
      %106 = vmatpush.msra.mxu0 0.0
      %107 = vmatpush.msra.mxu0 0.0
      %108 = vmatpush.msra.mxu0 0.0
      %109 = vmatpush.msra.mxu0 0.0
      %110 = vmatpush.msra.mxu0 0.0
      %111 = vmatpush.msra.mxu0 0.0
      %112 = vmatpush.msra.mxu0 0.0
      %113 = vmatpush.msra.mxu0 0.0
      %114 = vmatpush.msra.mxu0 %v97
      %115 = vmatmul.f32.gmra.mxu0 %v94
      %v116 = vpop.f32.mrf.mxu0
      %v117 = vadd.f32 %v90, %v116
      %118 = vdwg.mxu0
      %v119 = vmax.f32 %v117, 0.0
      %v120 = vld [vmem:[%s3] sm:$0x3]
      %v121 = vld [vmem:[%s4] sm:$0x1]
      %v123 = vperm.slane %v121, 0
      %vm125 = vcmask 15360
      %v127 = vsel %vm125, %v119, 0
      %vm129 = vcmask 1041408
      %v131 = vsel %vm129, %v120, 0
      %133 = vmatpush.msra.mxu0 0.0
      %134 = vmatpush.msra.mxu0 0.0
      %135 = vmatpush.msra.mxu0 0.0
      %136 = vmatpush.msra.mxu0 0.0
      %137 = vmatpush.msra.mxu0 0.0
      %138 = vmatpush.msra.mxu0 0.0
      %139 = vmatpush.msra.mxu0 0.0
      %140 = vmatpush.msra.mxu0 0.0
      %141 = vmatpush.msra.mxu0 0.0
      %142 = vmatpush.msra.mxu0 0.0
      %143 = vmatpush.msra.mxu0 0.0
      %144 = vmatpush.msra.mxu0 0.0
      %145 = vmatpush.msra.mxu0 0.0
      %146 = vmatpush.msra.mxu0 0.0
      %147 = vmatpush.msra.mxu0 0.0
      %148 = vmatpush.msra.mxu0 %v131
      %149 = vmatmul.f32.gmra.mxu0 %v127
      %v150 = vpop.f32.mrf.mxu0
      %v151 = vadd.f32 %v123, %v150
      %152 = vdwg.mxu0
      %v153 = vxor.u32 %v151, 2147483648
      %v154 = vmul.f32 %v153, 1.442695
      %v155 = vpow.pop %v154
      %v156 = vadd.f32 %v155, 1.0
      %v157 = vrcp.pop %v156
      %v158 = vmul.f32 %v156, %v157
      %v159 = vsub.f32 1.0, %v158
      %v160 = vmul.f32 %v157, %v159
      %v161 = vadd.f32 %v157, %v160
      %vm162 = vweird.f32 %v156
      %vm163 = vweird.f32 %v157
      %vm164 = vmor %vm162, %vm163
      %v165 = vsel %vm164, %v157, %v161
      %v166 = vand.u32 2147483647, %v156
      %vm167 = vcmp.eq.f32.partialorder %v166, 8.507059e+37
      %v168 = vand.u32 %v156, 2147483648
      %v169 = vor.u32 1.1754944e-38, %v168
      %v170 = vsel %vm167, %v169, %v165
      %v171 = vmul.f32 1.0, %v170
      %v172 = vsub.f32 1.0, %v171
      %173 = vst.msk [vmem:[#allocation6] sm:$0x3] %vm80, %v172
    $region33: #{tpu_custom_call.1} parent=1 // pred_fallthru
      _
    // Predicated region
    $region34: #{tpu_custom_call.1} parent=1 // pred_check
      _
    $region35: #{tpu_custom_call.1} parent=1 // pred_check_branch
      %175 = sbr.rel (0) target = $region37
    $region36: #{tpu_custom_call.1} parent=1 // pred_region
      %177 = vsyncadd [#allocation5], 0
      %s179 = sshll.u32 [#allocation6], 4
      %s180 = int_to_ptr.vmem [resolvable:$true] %s179
      %s181 = sshll.u32 %s5, 4
      %s182 = int_to_ptr.hbm [resolvable:$true] %s181
      %184 = dma.vmem_to_hbm [thread:$0]  %s180, 32, %s182, [#allocation5]
    $region37: #{tpu_custom_call.1} parent=1 // pred_fallthru
      _
    // Predicated region
    $region38: #{tpu_custom_call.1} parent=1 // pred_check
      _
    $region39: #{tpu_custom_call.1} parent=1 // pred_check_branch
      %186 = sbr.rel (0) target = $region41
    $region40: #{tpu_custom_call.1} parent=1 // pred_region
      %188 = dma.done [#allocation5], 32
    $region41: #{tpu_custom_call.1} parent=1 // pred_fallthru
      _
    %189 = vsyncpa [#allocation4], 1
    %190 = vsyncpa [#allocation5], 1

</llo_original>
